<compile_context>
chip_gen: v7x
topology: tpu7x:2x2x1
jax: 0.10.0
libtpu: 0.0.40
codegen_flags: <defaults>
</compile_context>

<pallas_src>
import math

import jax
import jax.numpy as jnp
from jax.experimental import pallas as pl
from jax.experimental.pallas import tpu as pltpu


def _conv_tanh_kernel(p_ref, w_ref, b_ref, o_ref):
    """One (image, row-block) step.

    p_ref: (K, TL)  patch columns for this slab (K = C*2*2, TL = T_Ho*Wo)
    w_ref: (O, K)   VMEM-resident weights (constant block index -> fetched once)
    b_ref: (O, 1)   VMEM-resident bias
    o_ref: (O, TL)  output slab, already in (N, O, Ho*Wo) i.e. NCHW order
    """
    # MXU matmul with f32 accumulate; bias-add on VPU; tanh on EUP (real columns only).
    acc = jnp.dot(w_ref[...], p_ref[...], preferred_element_type=jnp.float32)
    acc = acc + b_ref[...]                       # (O, 1) lane-broadcast over TL
    o_ref[...] = jnp.tanh(acc).astype(o_ref.dtype)


def _pick_row_block(Ho, Wo, K, O, *, want_split, block_budget_bytes):
    """Largest Ho-block T_Ho such that the (T_Ho*Wo) lane extent is BlockSpec-legal
    (multiple of 128, or the full Ho*Wo) and the streamed blocks fit the budget."""

    def blk_bytes(t):
        # double-buffered streamed input + output blocks (weights/bias are tiny, resident)
        return 4 * t * Wo * 2 * (K + O)

    legal = [d for d in range(Ho, 0, -1)
             if Ho % d == 0 and ((d * Wo) % 128 == 0 or d == Ho)]
    fits = [d for d in legal if blk_bytes(d) <= block_budget_bytes]
    if want_split:  # prefer >=2 grid steps (v7x megacore) when batch alone can't provide them
        split = [d for d in fits if d < Ho]
        if split:
            return split[0]
    if fits:
        return fits[0]
    return legal[-1]


def conv2d_tanh(x, weight, bias):
    """x: (N, C, H, W) f32; weight: (O, C, 2, 2); bias: (O,).

    Returns (N, O, H//2, W//2) f32, matching
    torch.nn.Sequential(nn.Conv2d(C, O, 2, stride=2, padding=0), nn.Tanh()).
    """
    N, C, H, W = x.shape
    O = weight.shape[0]
    Ho, Wo = H // 2, W // 2
    K = C * 4

    # PyTorch Conv2d(k=2, s=2, p=0) silently drops a trailing odd row/column.
    x = x[:, :, : 2 * Ho, : 2 * Wo]

    # --- XLA glue: space-to-depth, pre-transposed so the kernel's matmul result
    # lands directly in (O, Ho*Wo) == NCHW order (no output epilogue pass).
    # p[n, c*4 + dh*2 + dw, ho*Wo + wo] = x[n, c, 2*ho+dh, 2*wo+dw]
    p = x.reshape(N, C, Ho, 2, Wo, 2)
    p = p.transpose(0, 1, 3, 5, 2, 4)            # (N, C, 2, 2, Ho, Wo)
    p = p.reshape(N, K, Ho * Wo).astype(jnp.float32)

    # Row ordering of w_mat matches the (c, dh, dw) ordering of p above.
    w_mat = weight.reshape(O, K).astype(jnp.float32)          # (O, K), un-padded
    b_mat = bias.astype(jnp.float32).reshape(O, 1)             # (O, 1)

    t_ho = _pick_row_block(Ho, Wo, K, O,
                           want_split=(N < 2),
                           block_budget_bytes=8 * 1024 * 1024)
    n_hb = Ho // t_ho
    tl = t_ho * Wo                               # lane extent of streamed blocks

    cost = pl.CostEstimate(
        flops=2 * N * Ho * Wo * K * O,
        transcendentals=N * Ho * Wo * O,
        bytes_accessed=4 * (N * K * Ho * Wo + K * O + O + N * O * Ho * Wo),
    )

    out_flat = pl.pallas_call(
        _conv_tanh_kernel,
        out_shape=jax.ShapeDtypeStruct((N, O, Ho * Wo), jnp.float32),
        grid=(N, n_hb),
        in_specs=[
            # streamed patch slabs; (K, tl) block: K is the full dim, tl is legal by
            # construction.  (Add pipeline_mode=pl.Buffered(3) here only if a profile
            # shows exposed input DMA.)
            pl.BlockSpec((None, K, tl), lambda n, h: (n, 0, h)),
            pl.BlockSpec((O, K), lambda n, h: (0, 0)),         # weights, VMEM-resident
            pl.BlockSpec((O, 1), lambda n, h: (0, 0)),         # bias,    VMEM-resident
        ],
        out_specs=pl.BlockSpec((None, O, tl), lambda n, h: (n, 0, h)),
        compiler_params=pltpu.CompilerParams(
            dimension_semantics=("parallel", "parallel"),       # megacore split on v7x
            vmem_limit_bytes=32 * 1024 * 1024,                  # fits v5e/v6e/v7x
        ),
        cost_estimate=cost,
    )(p, w_mat, b_mat)

    # Free reshape (contiguous trailing-dim split) back to NCHW — no transpose pass.
    return out_flat.reshape(N, O, Ho, Wo)


def init_params(key, in_ch, out_ch):
    """Deterministic init mimicking PyTorch Conv2d defaults (kaiming uniform)."""
    kw, kb = jax.random.split(key)
    fan_in = in_ch * 2 * 2
    bound = 1.0 / math.sqrt(fan_in)
    weight = jax.random.uniform(
        kw, (out_ch, in_ch, 2, 2), minval=-bound, maxval=bound, dtype=jnp.float32
    )
    bias = jax.random.uniform(
        kb, (out_ch,), minval=-bound, maxval=bound, dtype=jnp.float32
    )
    return weight, bias


if __name__ == "__main__":
    key = jax.random.PRNGKey(0)
    k_x, k_p = jax.random.split(key)

    N, C, H, W = 2, 4, 16, 16
    out_ch = 8

    x = jax.random.normal(k_x, (N, C, H, W), dtype=jnp.float32)
    weight, bias = init_params(k_p, C, out_ch)

    conv = jax.jit(conv2d_tanh)
    out = conv(x, weight, bias)
    out = jax.block_until_ready(out)

    # Reference: lax conv (NCHW/OIHW, stride 2, VALID) + bias + tanh.
    ref = jax.lax.conv_general_dilated(
        x, weight, window_strides=(2, 2), padding="VALID",
        dimension_numbers=("NCHW", "OIHW", "NCHW"),
    ) + bias.reshape(1, out_ch, 1, 1)
    ref = jnp.tanh(ref)

    assert out.shape == (N, out_ch, H // 2, W // 2), out.shape
    assert jnp.allclose(out, ref, atol=1e-5, rtol=1e-5)

    print("KERNEL_OK")
</pallas_src>

<mosaic_0001>
module attributes {stable_mosaic.version = 11 : i64} {
  func.func @_conv_tanh_kernel(%arg0: i32, %arg1: i32, %arg2: memref<1x16x64xf32, #tpu.memory_space<vmem>>, %arg3: memref<8x16xf32, #tpu.memory_space<vmem>>, %arg4: memref<8x1xf32, #tpu.memory_space<vmem>>, %arg5: memref<1x8x64xf32, #tpu.memory_space<vmem>>) attributes {dimension_semantics = [#tpu.dimension_semantics<parallel>, #tpu.dimension_semantics<parallel>], iteration_bounds = array<i64: 2, 1>, scalar_prefetch = 0 : i64, scratch_operands = 0 : i64, tpu.core_type = #tpu.core_type<tc>, window_params = [{transform_indices = @transform_0, window_bounds = array<i64: 1, 16, 64>}, {pipeline_mode = #tpu.pipeline_mode<synchronous>, transform_indices = @transform_1, window_bounds = array<i64: 8, 16>}, {pipeline_mode = #tpu.pipeline_mode<synchronous>, transform_indices = @transform_2, window_bounds = array<i64: 8, 1>}, {transform_indices = @transform_3, window_bounds = array<i64: 1, 8, 64>}]} {
    %c0 = arith.constant 0 : index
    %c0_0 = arith.constant 0 : index
    %0 = vector.load %arg3[%c0, %c0_0] : memref<8x16xf32, #tpu.memory_space<vmem>>, vector<8x16xf32>
    %c0_1 = arith.constant 0 : index
    %c0_2 = arith.constant 0 : index
    %c0_3 = arith.constant 0 : index
    %1 = vector.load %arg2[%c0_1, %c0_2, %c0_3] : memref<1x16x64xf32, #tpu.memory_space<vmem>>, vector<1x16x64xf32>
    %2 = vector.shape_cast %1 : vector<1x16x64xf32> to vector<16x64xf32>
    %cst = arith.constant dense<0.000000e+00> : vector<8x64xf32>
    %3 = tpu.matmul %0, %2, %cst {dimension_numbers = #tpu.dot_dimension_numbers<[1], [0], [0], [1], [0, 0, 1, 1], [], []>} : vector<8x16xf32>, vector<16x64xf32>, vector<8x64xf32> -> vector<8x64xf32>
    %c0_4 = arith.constant 0 : index
    %c0_5 = arith.constant 0 : index
    %4 = vector.load %arg4[%c0_4, %c0_5] : memref<8x1xf32, #tpu.memory_space<vmem>>, vector<8x1xf32>
    %5 = vector.broadcast %4 : vector<8x1xf32> to vector<8x64xf32>
    %6 = arith.addf %3, %5 : vector<8x64xf32>
    %7 = math.tanh %6 : vector<8x64xf32>
    %c0_6 = arith.constant 0 : index
    %c0_7 = arith.constant 0 : index
    %c0_8 = arith.constant 0 : index
    %8 = vector.load %arg5[%c0_6, %c0_7, %c0_8] : memref<1x8x64xf32, #tpu.memory_space<vmem>>, vector<1x8x64xf32>
    %9 = vector.shape_cast %8 : vector<1x8x64xf32> to vector<8x64xf32>
    %10 = vector.shape_cast %7 : vector<8x64xf32> to vector<1x8x64xf32>
    tpu.vector_store %arg5[%c0_6, %c0_7, %c0_8], %10 {strides = array<i32>} : memref<1x8x64xf32, #tpu.memory_space<vmem>>, vector<1x8x64xf32>,
    return
  }
  func.func @transform_0(%arg0: i32, %arg1: i32) -> (i32, i32, i32) {
    %c0_i32 = arith.constant 0 : i32
    %c0_i32_0 = arith.constant 0 : i32
    return %arg0, %c0_i32, %arg1 : i32, i32, i32
  }
  func.func @transform_1(%arg0: i32, %arg1: i32) -> (i32, i32) {
    %c0_i32 = arith.constant 0 : i32
    %c0_i32_0 = arith.constant 0 : i32
    %c0_i32_1 = arith.constant 0 : i32
    return %c0_i32, %c0_i32_0 : i32, i32
  }
  func.func @transform_2(%arg0: i32, %arg1: i32) -> (i32, i32) {
    %c0_i32 = arith.constant 0 : i32
    %c0_i32_0 = arith.constant 0 : i32
    %c0_i32_1 = arith.constant 0 : i32
    return %c0_i32, %c0_i32_0 : i32, i32
  }
  func.func @transform_3(%arg0: i32, %arg1: i32) -> (i32, i32, i32) {
    %c0_i32 = arith.constant 0 : i32
    %c0_i32_0 = arith.constant 0 : i32
    return %arg0, %c0_i32, %arg1 : i32, i32, i32
  }
}

</mosaic_0001>

<llo_original>
// kernel: conv2d_tanh.1
$region0: #{conv2d_tanh.1}
  #allocation0 [shape = 'u32[]', space=smem, size = 0x4, offset = 0x4, fixed_abs, tag = 'smem constant byte address 0x4 - core index']
  #allocation1 [shape = 'u32[144,128]{1,0:T(1,128)}', space=vmem, size = 0x12000, scoped, tag = 'internal scratch']
  %s0 = inlined_call_operand.vmem [shape: f32[2,16,64], index: 0, kind: input, shape index: {}]
  %s1 = inlined_call_operand.vmem [shape: f32[8,16], index: 1, kind: input, shape index: {}]
  %s2 = inlined_call_operand.vmem [shape: f32[8,1], index: 2, kind: input, shape index: {}]
  %s3 = inlined_call_operand.vmem [shape: f32[2,8,64], index: 3, kind: output, shape index: {}]
  %s4 = sld [smem:[#allocation0]]
  $region45: #{conv2d_tanh.1} parent=0
    _
  %s6 = ssub.s32 1, %s4
  %s7 = scalar_select 0, %s6, %s4
  loop: start=0, step=1, limit=4
  $region2: #{conv2d_tanh.1} parent=0 // loop_pre_header
    _
  $region3: #{conv2d_tanh.1} parent=0 // loop_header
    %s9 = sphi 0, %s13
    %p10 = scmp.ge.s32.totalorder %s9, 4
    %s16 = sphi 0, %s28
    %s17 = sphi 0, %s24
    %s18 = sphi 0, %s16
    %s19 = sphi 0, %s17
    %s20 = sphi 0, %s18
    %s21 = sphi 0, %s19
    %s33 = sphi 0, %s35
    %s36 = sphi 0, %s33
    %s37 = sphi 0, %s36
    %s53 = sphi 0, %s37
    %s57 = sphi 0, %s57
    %s59 = sphi 0, %s57
    %s60 = sphi 0, %s59
    %s74 = sphi 0, %s60
    %s78 = sphi 0, %s78
    %s80 = sphi 0, %s78
    %s81 = sphi 0, %s80
    %s95 = sphi 0, %s81
    %s103 = sphi 0, %s105
    %s106 = sphi 0, %s103
    %s107 = sphi 0, %s106
    %s123 = sphi 0, %s107
  $region4: #{conv2d_tanh.1} parent=0 // loop_header_branch
    %12 = sbr.rel (%p10) target = $region8
  $region5: #{conv2d_tanh.1} parent=0 // loop_body
    %s14 = ssub.s32 %s9, 1
    %s15 = ssub.s32 %s9, 2
    %s22 = sadd.s32 1, %s17
    %p23 = scmp.ge.s32.totalorder %s22, 1
    %s24 = scalar_select %p23, 0, %s22
    %s25 = sadd.s32 1, %s16
    %s26 = scalar_select %p23, %s25, %s16
    %p27 = scmp.ge.s32.totalorder %s26, 2
    %s28 = scalar_select %p27, 0, %s26
    %s29 = ssub.s32 %s16, %s28
    %s30 = ssub.s32 %s17, %s24
    %s31 = sor.u32 %s29, %s30
    %p32 = scmp.eq.s32.totalorder %s31, 0
    %s34 = sadd.s32 %s33, 1
    %s35 = scalar_select %p32, %s33, %s34
    %p38 = pneg %p32
    %p39 = scmp.eq.s32.totalorder %s9, 1
    %p40 = por %p38, %p39
    %p41 = scmp.ne.s32.totalorder %s33, %s36
    %p42 = scmp.eq.s32.totalorder %s9, 0
    %p43 = por %p41, %p42
    %p44 = scmp.ne.s32.totalorder %s33, %s36
    %p45 = scmp.eq.s32.totalorder %s14, 1
    %p46 = por %p44, %p45
    %p47 = scmp.ne.s32.totalorder %s36, %s37
    %p48 = scmp.eq.s32.totalorder %s14, 0
    %p49 = por %p47, %p48
    %p50 = scmp.ne.s32.totalorder %s36, %s37
    %p51 = scmp.eq.s32.totalorder %s15, 1
    %p52 = por %p50, %p51
    %p54 = scmp.ne.s32.totalorder %s37, %s53
    %p55 = scmp.eq.s32.totalorder %s15, 0
    %p56 = por %p54, %p55
    %s58 = sadd.s32 %s57, 1
    %p61 = scmp.eq.s32.totalorder %s9, 1
    %p62 = scmp.ne.s32.totalorder %s57, %s59
    %p63 = scmp.eq.s32.totalorder %s9, 0
    %p64 = por %p62, %p63
    %p65 = scmp.ne.s32.totalorder %s57, %s59
    %p66 = scmp.eq.s32.totalorder %s14, 1
    %p67 = por %p65, %p66
    %p68 = scmp.ne.s32.totalorder %s59, %s60
    %p69 = scmp.eq.s32.totalorder %s14, 0
    %p70 = por %p68, %p69
    %p71 = scmp.ne.s32.totalorder %s59, %s60
    %p72 = scmp.eq.s32.totalorder %s15, 1
    %p73 = por %p71, %p72
    %p75 = scmp.ne.s32.totalorder %s60, %s74
    %p76 = scmp.eq.s32.totalorder %s15, 0
    %p77 = por %p75, %p76
    %s79 = sadd.s32 %s78, 1
    %p82 = scmp.eq.s32.totalorder %s9, 1
    %p83 = scmp.ne.s32.totalorder %s78, %s80
    %p84 = scmp.eq.s32.totalorder %s9, 0
    %p85 = por %p83, %p84
    %p86 = scmp.ne.s32.totalorder %s78, %s80
    %p87 = scmp.eq.s32.totalorder %s14, 1
    %p88 = por %p86, %p87
    %p89 = scmp.ne.s32.totalorder %s80, %s81
    %p90 = scmp.eq.s32.totalorder %s14, 0
    %p91 = por %p89, %p90
    %p92 = scmp.ne.s32.totalorder %s80, %s81
    %p93 = scmp.eq.s32.totalorder %s15, 1
    %p94 = por %p92, %p93
    %p96 = scmp.ne.s32.totalorder %s81, %s95
    %p97 = scmp.eq.s32.totalorder %s15, 0
    %p98 = por %p96, %p97
    %s99 = ssub.s32 %s16, %s28
    %s100 = ssub.s32 %s17, %s24
    %s101 = sor.u32 %s99, %s100
    %p102 = scmp.eq.s32.totalorder %s101, 0
    %s104 = sadd.s32 %s103, 1
    %s105 = scalar_select %p102, %s103, %s104
    %p108 = pneg %p102
    %p109 = scmp.eq.s32.totalorder %s9, 1
    %p110 = por %p108, %p109
    %p111 = scmp.ne.s32.totalorder %s103, %s106
    %p112 = scmp.eq.s32.totalorder %s9, 0
    %p113 = por %p111, %p112
    %p114 = scmp.ne.s32.totalorder %s103, %s106
    %p115 = scmp.eq.s32.totalorder %s14, 1
    %p116 = por %p114, %p115
    %p117 = scmp.ne.s32.totalorder %s106, %s107
    %p118 = scmp.eq.s32.totalorder %s14, 0
    %p119 = por %p117, %p118
    %p120 = scmp.ne.s32.totalorder %s106, %s107
    %p121 = scmp.eq.s32.totalorder %s15, 1
    %p122 = por %p120, %p121
    %p124 = scmp.ne.s32.totalorder %s107, %s123
    %p125 = scmp.eq.s32.totalorder %s15, 0
    %p126 = por %p124, %p125
    %p127 = scmp.le.s32.totalorder 1, %s9
    %p128 = scmp.lt.s32.totalorder %s9, 3
    %p129 = pnand %p127, %p128
    %p130 = pneg %p129
    // Predicated region
    $region9: #{conv2d_tanh.1} parent=5 // pred_check
      _
    $region10: #{conv2d_tanh.1} parent=5 // pred_check_branch
      %132 = sbr.rel (%p129) target = $region12
    $region11: #{conv2d_tanh.1} parent=5 // pred_region
      %s133 = ssub.s32 %s9, 1
      // Predicated region
      $region13: #{conv2d_tanh.1} parent=11 // pred_check
        %p134 = pneg %p70
      $region14: #{conv2d_tanh.1} parent=11 // pred_check_branch
        %136 = sbr.rel (%p134) target = $region16
      $region15: #{conv2d_tanh.1} parent=11 // pred_region
        _
      $region16: #{conv2d_tanh.1} parent=11 // pred_fallthru
        _
      // Predicated region
      $region17: #{conv2d_tanh.1} parent=11 // pred_check
        %p137 = pneg %p91
      $region18: #{conv2d_tanh.1} parent=11 // pred_check_branch
        %139 = sbr.rel (%p137) target = $region20
      $region19: #{conv2d_tanh.1} parent=11 // pred_region
        _
      $region20: #{conv2d_tanh.1} parent=11 // pred_fallthru
        _
    $region12: #{conv2d_tanh.1} parent=5 // pred_fallthru
      _
    %p140 = scmp.lt.s32.totalorder %s9, 2
    // Predicated region
    $region21: #{conv2d_tanh.1} parent=5 // pred_check
      %p141 = pneg %p140
    $region22: #{conv2d_tanh.1} parent=5 // pred_check_branch
      %143 = sbr.rel (%p141) target = $region24
    $region23: #{conv2d_tanh.1} parent=5 // pred_region
      // Predicated region
      $region25: #{conv2d_tanh.1} parent=23 // pred_check
        %p144 = pneg %p43
      $region26: #{conv2d_tanh.1} parent=23 // pred_check_branch
        %146 = sbr.rel (%p144) target = $region28
      $region27: #{conv2d_tanh.1} parent=23 // pred_region
        %p147 = scmp.lt.s32.totalorder %s16, 1
        %s148 = scalar_select %p147, %s16, 1
        %p149 = scmp.lt.s32.totalorder %s17, 0
        %s150 = scalar_select %p149, %s17, 0
        %s151 = smul.addr %s148, 2
        %s152 = sadd.s32 %s150, %s151
        %s153 = smul.addr %s152, 8
        %s154 = scalar_lea.vmem %s0, %s153
      $region28: #{conv2d_tanh.1} parent=23 // pred_fallthru
        _
    $region24: #{conv2d_tanh.1} parent=5 // pred_fallthru
      _
    %p155 = scmp.le.s32.totalorder 1, %s9
    %p156 = scmp.lt.s32.totalorder %s9, 3
    %p157 = pnand %p155, %p156
    %p158 = pneg %p157
    // Predicated region
    $region29: #{conv2d_tanh.1} parent=5 // pred_check
      _
    $region30: #{conv2d_tanh.1} parent=5 // pred_check_branch
      %160 = sbr.rel (%p157) target = $region32
    $region31: #{conv2d_tanh.1} parent=5 // pred_region
      %s161 = ssub.s32 %s9, 1
      %p162 = scmp.lt.s32.totalorder %s18, 1
      %s163 = scalar_select %p162, %s18, 1
      %p164 = scmp.lt.s32.totalorder %s19, 0
      %s165 = scalar_select %p164, %s19, 0
      %s166 = smul.addr %s163, 2
      %s167 = sadd.s32 %s165, %s166
      %s168 = smul.addr %s167, 8
      %s169 = scalar_lea.vmem %s0, %s168
      %p170 = pneg %p49
      %p171 = pneg %p46
      %p172 = pneg %p70
      %p173 = pneg %p67
      %p174 = pneg %p91
      %p175 = pneg %p88
      %p176 = pneg %p119
      %p177 = pneg %p116
      %p178 = scmp.lt.s32.totalorder %s18, 1
      %s179 = scalar_select %p178, %s18, 1
      %p180 = scmp.lt.s32.totalorder %s19, 0
      %s181 = scalar_select %p180, %s19, 0
      %s182 = sadd.s32 %s181, %s179
      %s183 = smul.addr %s182, 8
      %s184 = scalar_lea.vmem %s3, %s183
      %p185 = scmp.lt.s32.totalorder %s18, 1
      %s186 = scalar_select %p185, %s18, 1
      %p187 = scmp.lt.s32.totalorder %s19, 0
      %s188 = scalar_select %p187, %s19, 0
      %s189 = smul.addr %s186, 2
      %s190 = sadd.s32 %s188, %s189
      %s191 = smul.addr %s190, 8
      %s192 = scalar_lea.vmem %s0, %s191
      %p193 = scmp.lt.s32.totalorder %s18, 1
      %s194 = scalar_select %p193, %s18, 1
      %p195 = scmp.lt.s32.totalorder %s19, 0
      %s196 = scalar_select %p195, %s19, 0
      %s197 = sadd.s32 %s196, %s194
      %s198 = smul.addr %s197, 8
      %s199 = scalar_lea.vmem %s3, %s198
      %v200 = vld [vmem:[%s1] sm:$0xff]
      %v201 = vld [vmem:[%s192] sm:$0xff]
      %v202 = vld [vmem:[%s192 + $0x8] sm:$0xff]
      %v203 = vld [vmem:[%s2] sm:$0xff]
      %205 = vset.pattern.permute.xlu0 0
      %206 = vperm.xlu0 %205, %v203
      %v207 = vpop.permute.xlu0 %206
      %vm209 = vcmask 130048
      %v211 = vsel %vm209, %v200, 0
      %213 = vmatprep.subr.mxu0 0.0
      %214 = vmatpush1.msra.mxu0 %v201
      %215 = vmatprep.subr.mxu0 0.0
      %216 = vmatpush1.msra.mxu0 %v202
      %217 = vmatprep.subr.mxu0 0.0
      %218 = vmatpush1.msra.mxu0 0.0
      %219 = vmatprep.subr.mxu0 0.0
      %220 = vmatpush1.msra.mxu0 0.0
      %221 = vmatprep.subr.mxu0 0.0
      %222 = vmatpush1.msra.mxu0 0.0
      %223 = vmatprep.subr.mxu0 0.0
      %224 = vmatpush1.msra.mxu0 0.0
      %225 = vmatprep.subr.mxu0 0.0
      %226 = vmatpush1.msra.mxu0 0.0
      %227 = vmatprep.subr.mxu0 0.0
      %228 = vmatpush1.msra.mxu0 0.0
      %229 = vmatprep.subr.mxu0 0.0
      %230 = vmatpush1.msra.mxu0 0.0
      %231 = vmatprep.subr.mxu0 0.0
      %232 = vmatpush1.msra.mxu0 0.0
      %233 = vmatprep.subr.mxu0 0.0
      %234 = vmatpush1.msra.mxu0 0.0
      %235 = vmatprep.subr.mxu0 0.0
      %236 = vmatpush1.msra.mxu0 0.0
      %237 = vmatprep.subr.mxu0 0.0
      %238 = vmatpush1.msra.mxu0 0.0
      %239 = vmatprep.subr.mxu0 0.0
      %240 = vmatpush1.msra.mxu0 0.0
      %241 = vmatprep.subr.mxu0 0.0
      %242 = vmatpush1.msra.mxu0 0.0
      %243 = vmatprep.subr.mxu0 0.0
      %244 = vmatpush1.msra.mxu0 0.0
      %245 = vmatprep.subr.mxu0 0.0
      %246 = vmatpush1.msra.mxu0 0.0
      %247 = vmatprep.subr.mxu0 0.0
      %248 = vmatpush1.msra.mxu0 0.0
      %249 = vmatprep.subr.mxu0 0.0
      %250 = vmatpush1.msra.mxu0 0.0
      %251 = vmatprep.subr.mxu0 0.0
      %252 = vmatpush1.msra.mxu0 0.0
      %253 = vmatprep.subr.mxu0 0.0
      %254 = vmatpush1.msra.mxu0 0.0
      %255 = vmatprep.subr.mxu0 0.0
      %256 = vmatpush1.msra.mxu0 0.0
      %257 = vmatprep.subr.mxu0 0.0
      %258 = vmatpush1.msra.mxu0 0.0
      %259 = vmatprep.subr.mxu0 0.0
      %260 = vmatpush1.msra.mxu0 0.0
      %261 = vmatprep.subr.mxu0 0.0
      %262 = vmatpush1.msra.mxu0 0.0
      %263 = vmatprep.subr.mxu0 0.0
      %264 = vmatpush1.msra.mxu0 0.0
      %265 = vmatprep.subr.mxu0 0.0
      %266 = vmatpush1.msra.mxu0 0.0
      %267 = vmatprep.subr.mxu0 0.0
      %268 = vmatpush1.msra.mxu0 0.0
      %269 = vmatprep.subr.mxu0 0.0
      %270 = vmatpush1.msra.mxu0 0.0
      %271 = vmatprep.subr.mxu0 0.0
      %272 = vmatpush1.msra.mxu0 0.0
      %273 = vmatprep.subr.mxu0 0.0
      %274 = vmatpush1.msra.mxu0 0.0
      %275 = vmatprep.subr.mxu0 0.0
      %276 = vmatpush1.msra.mxu0 0.0
      %277 = vmatprep.mubr.f32.mxu0 0.0
      %278 = vmatmul.mubr.f32.gmra.mrb[0].mxu0 %v211
      %v279 = vpop.f32.mrb[0].mxu0
      %v280 = vadd.f32 %v207, %v279
      %v281 = vpop.f32.mrb[0].mxu0
      %282 = vdwg.mxu0
      %v283 = vtanh.pop %v280
      %vm284 = vcmask 523264
      %285 = vst.msk [vmem:[%s199] sm:$0xff] %vm284, %v283
      %p286 = scmp.lt.s32.totalorder %s18, 1
      %s287 = scalar_select %p286, %s18, 1
      %p288 = scmp.lt.s32.totalorder %s19, 0
      %s289 = scalar_select %p288, %s19, 0
      %s290 = sadd.s32 %s289, %s287
      %s291 = smul.addr %s290, 8
      %s292 = scalar_lea.vmem %s3, %s291
      // Predicated region
      $region33: #{conv2d_tanh.1} parent=31 // pred_check
        %p293 = pneg %p116
      $region34: #{conv2d_tanh.1} parent=31 // pred_check_branch
        %295 = sbr.rel (%p293) target = $region36
      $region35: #{conv2d_tanh.1} parent=31 // pred_region
        _
      $region36: #{conv2d_tanh.1} parent=31 // pred_fallthru
        _
    $region32: #{conv2d_tanh.1} parent=5 // pred_fallthru
      _
    %p296 = scmp.le.s32.totalorder 2, %s9
    // Predicated region
    $region37: #{conv2d_tanh.1} parent=5 // pred_check
      %p297 = pneg %p296
    $region38: #{conv2d_tanh.1} parent=5 // pred_check_branch
      %299 = sbr.rel (%p297) target = $region40
    $region39: #{conv2d_tanh.1} parent=5 // pred_region
      %s300 = ssub.s32 %s9, 2
      // Predicated region
      $region41: #{conv2d_tanh.1} parent=39 // pred_check
        %p301 = pneg %p122
      $region42: #{conv2d_tanh.1} parent=39 // pred_check_branch
        %303 = sbr.rel (%p301) target = $region44
      $region43: #{conv2d_tanh.1} parent=39 // pred_region
        %p304 = scmp.lt.s32.totalorder %s20, 1
        %s305 = scalar_select %p304, %s20, 1
        %p306 = scmp.lt.s32.totalorder %s21, 0
        %s307 = scalar_select %p306, %s21, 0
        %s308 = sadd.s32 %s307, %s305
        %s309 = smul.addr %s308, 8
        %s310 = scalar_lea.vmem %s3, %s309
      $region44: #{conv2d_tanh.1} parent=39 // pred_fallthru
        _
    $region40: #{conv2d_tanh.1} parent=5 // pred_fallthru
      _
  $region6: #{conv2d_tanh.1} parent=0 // loop_footer
    %s13 = sadd.s32 1, %s9
  $region7: #{conv2d_tanh.1} parent=0 // loop_footer_branch
    %8 = sbr.rel target = $region3
  $region8: #{conv2d_tanh.1} parent=0 // loop_exit
    _

</llo_original>
